<compile_context>
chip_gen: v7x
topology: tpu7x:2x2x1
jax: 0.10.0
libtpu: 0.0.40
codegen_flags: <defaults>
</compile_context>

<pallas_src>
import jax
import jax.numpy as jnp
from jax.experimental import pallas as pl
from jax.experimental.pallas import tpu as pltpu

HIDDEN = 128
NEG_SLOPE = 0.01  # torch.nn.LeakyReLU default


def _leaky_relu(x):
    # 2 VPU ops/elem (mul + max); equivalent to where(x>0, x, 0.01*x) for slope<1.
    return jnp.maximum(x, NEG_SLOPE * x)


def critic_kernel(x_ref, w1_ref, b1_ref, w2_ref, b2_ref, w3_ref, b3_ref, out_ref):
    # Fused MLP hot path: 2 MXU matmuls + VPU bias/LeakyReLU + XLU lane-reduce.
    x = x_ref[...]                                                        # (tb, D)

    # Layer 1: MXU matmul in x's dtype (bf16 fast path if x arrives in bf16),
    # f32 accumulation; bias + LeakyReLU stay f32 on the VPU.
    h1 = jnp.dot(x, w1_ref[...], preferred_element_type=jnp.float32) + b1_ref[...]
    h1 = _leaky_relu(h1)                                                  # (tb, 128) f32

    # Layer 2: all-f32 matmul (W2 is VMEM-resident; MXU has huge slack here,
    # and skipping an h1 f32->bf16 pack keeps work off the binding VALU slot).
    h2 = jnp.dot(h1, w2_ref[...], preferred_element_type=jnp.float32) + b2_ref[...]
    h2 = _leaky_relu(h2)                                                  # (tb, 128) f32

    # Layer 3 (out_features == 1): VPU multiply against the (1,128) w3 row and
    # an XLU lane reduction; b3 is a scalar in SMEM.
    v = jnp.sum(h2 * w3_ref[...], axis=-1, keepdims=True) + b3_ref[0, 0]  # (tb, 1)
    out_ref[...] = v.astype(out_ref.dtype)


def _choose_tb(B, D, x_itemsize, min_tile):
    """Largest power-of-two batch tile that divides B, gives >= 2 grid steps
    (pipelining; prefer an even step count for v7x's 2 TCs) and keeps the
    double-buffered x block + f32 h1/h2 intermediates well inside even v5e's
    16 MiB scoped-VMEM default."""
    budget = 10 * 1024 * 1024  # bytes for x double-buffer + h1/h2 intermediates

    def fits(cand):
        usage = 2 * cand * D * x_itemsize + 2 * cand * HIDDEN * 4
        return usage <= budget

    cands = [c for c in (8192, 4096, 2048, 1024, 512, 256, 128, 64, 32, 16, 8)
             if c >= min_tile]
    # Pass 1: even number of grid steps (clean 2-TC sharding on v7x).
    for c in cands:
        if B % c == 0 and (B // c) >= 2 and (B // c) % 2 == 0 and fits(c):
            return c
    # Pass 2: any >= 2 steps.
    for c in cands:
        if B % c == 0 and (B // c) >= 2 and fits(c):
            return c
    return B  # tiny / awkward batches: single block


def critic_forward(x, params, *, tb=None):
    """x: (B, state_dim) -> value: (B, 1) float32.

    The MXU feed dtype for layer 1 is x.dtype: pass x in bf16 (produced
    upstream, no extra HBM round-trip here) to halve the dominant x stream on
    any generation; accumulation and all elementwise work stay f32."""
    w1, b1, w2, b2, w3, b3 = params
    B, D = x.shape
    x_itemsize = jnp.dtype(x.dtype).itemsize
    min_tile = 8 if x_itemsize >= 4 else 16  # packed dtypes need 16 sublanes

    if tb is None:
        tb = _choose_tb(B, D, x_itemsize, min_tile)
    assert B % tb == 0, "batch must be divisible by the batch tile"
    assert tb == B or tb % min_tile == 0, (
        f"(tb, D) x block needs tb % {min_tile} == 0 (or tb == B) for dtype {x.dtype}")

    # Only the tiny W1 is cast to the MXU feed dtype; W2/biases/w3 stay f32.
    w1_c = w1.astype(x.dtype)
    w_itemsize = jnp.dtype(x.dtype).itemsize

    grid = (B // tb,)

    # Advisory cost for XLA scheduling (reflects actual dtypes / traffic).
    flops = 2 * B * (D * HIDDEN + HIDDEN * HIDDEN + HIDDEN)
    bytes_accessed = (
        B * D * x_itemsize                 # x
        + D * HIDDEN * w_itemsize          # W1 (fed in x.dtype)
        + HIDDEN * HIDDEN * 4              # W2 (f32)
        + (3 * HIDDEN + 1) * 4             # b1, b2, w3, b3 (f32)
        + B * 4                            # output
    )

    # Explicit VMEM budget from the real footprint (double-buffered blocks +
    # f32 intermediates), clamped to stay safe on v7x's 64 MiB physical VMEM.
    footprint = (
        2 * tb * D * x_itemsize            # x block, double buffered
        + 2 * tb * 4                       # out block, double buffered
        + 2 * D * HIDDEN * w_itemsize      # W1 (default double buffering)
        + 2 * HIDDEN * HIDDEN * 4          # W2
        + 2 * 3 * HIDDEN * 4               # b1, b2, w3
        + 2 * tb * HIDDEN * 4              # h1 / h2 intermediates
    )
    vmem_limit = int(min(48 << 20, max(16 << 20, footprint + (4 << 20))))

    return pl.pallas_call(
        critic_kernel,
        out_shape=jax.ShapeDtypeStruct((B, 1), jnp.float32),
        grid_spec=pltpu.PrefetchScalarGridSpec(
            num_scalar_prefetch=0,
            grid=grid,
            in_specs=[
                # x tile: the only per-step DMA; double-buffered by BlockSpec.
                pl.BlockSpec((tb, D), lambda i: (i, 0)),
                # Weights / biases: constant index maps -> VMEM-resident.
                pl.BlockSpec((D, HIDDEN), lambda i: (0, 0)),        # W1 (in, out)
                pl.BlockSpec((1, HIDDEN), lambda i: (0, 0)),        # b1
                pl.BlockSpec((HIDDEN, HIDDEN), lambda i: (0, 0)),   # W2 (in, out) f32
                pl.BlockSpec((1, HIDDEN), lambda i: (0, 0)),        # b2
                pl.BlockSpec((1, HIDDEN), lambda i: (0, 0)),        # W3 row (torch layout)
                pl.BlockSpec(memory_space=pltpu.MemorySpace.SMEM),  # b3 scalar
            ],
            out_specs=pl.BlockSpec((tb, 1), lambda i: (i, 0)),
        ),
        compiler_params=pltpu.CompilerParams(
            # Batch axis is independent -> megacore sharding on v7x (grid >= 2,
            # even step count preferred by _choose_tb).
            dimension_semantics=("parallel",),
            vmem_limit_bytes=vmem_limit,
        ),
        cost_estimate=pl.CostEstimate(
            flops=flops, transcendentals=0, bytes_accessed=bytes_accessed
        ),
    )(x, w1_c, b1, w2, b2, w3, b3)


def init_params(key, state_dim):
    """Deterministic synthetic init (shapes match the torch module)."""
    k1, k2, k3, k4, k5, k6 = jax.random.split(key, 6)
    # W1/W2 pre-transposed: (in_features, out_features). W3 kept as (1, 128).
    w1 = jax.random.normal(k1, (state_dim, HIDDEN), jnp.float32) * 0.05
    b1 = jax.random.normal(k2, (1, HIDDEN), jnp.float32) * 0.05
    w2 = jax.random.normal(k3, (HIDDEN, HIDDEN), jnp.float32) * 0.05
    b2 = jax.random.normal(k4, (1, HIDDEN), jnp.float32) * 0.05
    w3 = jax.random.normal(k5, (1, HIDDEN), jnp.float32) * 0.05
    b3 = jax.random.normal(k6, (1, 1), jnp.float32) * 0.05
    return (w1, b1, w2, b2, w3, b3)


def critic_ref(x, params):
    """Pure-JAX reference of the torch forward."""
    w1, b1, w2, b2, w3, b3 = params
    h = _leaky_relu(x @ w1 + b1)
    h = _leaky_relu(h @ w2 + b2)
    return h @ w3.T + b3


if __name__ == "__main__":
    key = jax.random.PRNGKey(0)
    kx, kp = jax.random.split(key)

    batch, state_dim = 256, 32   # -> tb=128, 2 grid steps (exercises the pipeline)
    x = jax.random.normal(kx, (batch, state_dim), jnp.float32)
    params = init_params(kp, state_dim)

    ref = critic_ref(x, params)

    # f32 path: exact check against the reference.
    out = jax.block_until_ready(critic_forward(x, params))
    assert out.shape == (batch, 1)
    assert jnp.allclose(out, ref, atol=1e-5, rtol=1e-5), "mismatch vs reference (f32)"

    # bf16 path: x produced in bf16 "upstream" (no wrapper-side re-cast of x);
    # layer-1 MXU runs bf16, everything else f32.  Loose tolerance.
    x_bf16 = x.astype(jnp.bfloat16)
    out_bf16 = jax.block_until_ready(critic_forward(x_bf16, params))
    assert out_bf16.shape == (batch, 1)
    assert jnp.allclose(out_bf16, ref, atol=5e-2, rtol=5e-2), "mismatch vs reference (bf16)"

    print("KERNEL_OK")
</pallas_src>

<mosaic_0001>
module attributes {stable_mosaic.version = 11 : i64} {
  func.func @critic_kernel(%arg0: i32, %arg1: memref<128x32xf32, #tpu.memory_space<vmem>>, %arg2: memref<32x128xf32, #tpu.memory_space<vmem>>, %arg3: memref<1x128xf32, #tpu.memory_space<vmem>>, %arg4: memref<128x128xf32, #tpu.memory_space<vmem>>, %arg5: memref<1x128xf32, #tpu.memory_space<vmem>>, %arg6: memref<1x128xf32, #tpu.memory_space<vmem>>, %arg7: memref<1x1xf32, #tpu.memory_space<smem>>, %arg8: memref<128x1xf32, #tpu.memory_space<vmem>>) attributes {dimension_semantics = [#tpu.dimension_semantics<parallel>], iteration_bounds = array<i64: 2>, scalar_prefetch = 0 : i64, scratch_operands = 0 : i64, tpu.core_type = #tpu.core_type<tc>, window_params = [{transform_indices = @transform_0, window_bounds = array<i64: 128, 32>}, {pipeline_mode = #tpu.pipeline_mode<synchronous>, transform_indices = @transform_1, window_bounds = array<i64: 32, 128>}, {pipeline_mode = #tpu.pipeline_mode<synchronous>, transform_indices = @transform_2, window_bounds = array<i64: 1, 128>}, {pipeline_mode = #tpu.pipeline_mode<synchronous>, transform_indices = @transform_3, window_bounds = array<i64: 128, 128>}, {pipeline_mode = #tpu.pipeline_mode<synchronous>, transform_indices = @transform_4, window_bounds = array<i64: 1, 128>}, {pipeline_mode = #tpu.pipeline_mode<synchronous>, transform_indices = @transform_5, window_bounds = array<i64: 1, 128>}, {transform_indices = @transform_6, window_bounds = array<i64: 1, 1>}, {transform_indices = @transform_7, window_bounds = array<i64: 128, 1>}]} {
    %c0 = arith.constant 0 : index
    %c0_0 = arith.constant 0 : index
    %0 = vector.load %arg1[%c0, %c0_0] : memref<128x32xf32, #tpu.memory_space<vmem>>, vector<128x32xf32>
    %c0_1 = arith.constant 0 : index
    %c0_2 = arith.constant 0 : index
    %1 = vector.load %arg2[%c0_1, %c0_2] : memref<32x128xf32, #tpu.memory_space<vmem>>, vector<32x128xf32>
    %cst = arith.constant dense<0.000000e+00> : vector<128x128xf32>
    %2 = tpu.matmul %0, %1, %cst {dimension_numbers = #tpu.dot_dimension_numbers<[1], [0], [0], [1], [0, 0, 1, 1], [], []>} : vector<128x32xf32>, vector<32x128xf32>, vector<128x128xf32> -> vector<128x128xf32>
    %c0_3 = arith.constant 0 : index
    %c0_4 = arith.constant 0 : index
    %3 = vector.load %arg3[%c0_3, %c0_4] : memref<1x128xf32, #tpu.memory_space<vmem>>, vector<1x128xf32>
    %4 = vector.broadcast %3 : vector<1x128xf32> to vector<128x128xf32>
    %5 = arith.addf %2, %4 : vector<128x128xf32>
    %cst_5 = arith.constant 0.00999999977 : f32
    %6 = vector.broadcast %cst_5 : f32 to vector<128x128xf32>
    %7 = arith.mulf %6, %5 : vector<128x128xf32>
    %8 = arith.maximumf %5, %7 : vector<128x128xf32>
    %c0_6 = arith.constant 0 : index
    %c0_7 = arith.constant 0 : index
    %9 = vector.load %arg4[%c0_6, %c0_7] : memref<128x128xf32, #tpu.memory_space<vmem>>, vector<128x128xf32>
    %cst_8 = arith.constant dense<0.000000e+00> : vector<128x128xf32>
    %10 = tpu.matmul %8, %9, %cst_8 {dimension_numbers = #tpu.dot_dimension_numbers<[1], [0], [0], [1], [0, 0, 1, 1], [], []>} : vector<128x128xf32>, vector<128x128xf32>, vector<128x128xf32> -> vector<128x128xf32>
    %c0_9 = arith.constant 0 : index
    %c0_10 = arith.constant 0 : index
    %11 = vector.load %arg5[%c0_9, %c0_10] : memref<1x128xf32, #tpu.memory_space<vmem>>, vector<1x128xf32>
    %12 = vector.broadcast %11 : vector<1x128xf32> to vector<128x128xf32>
    %13 = arith.addf %10, %12 : vector<128x128xf32>
    %cst_11 = arith.constant 0.00999999977 : f32
    %14 = vector.broadcast %cst_11 : f32 to vector<128x128xf32>
    %15 = arith.mulf %14, %13 : vector<128x128xf32>
    %16 = arith.maximumf %13, %15 : vector<128x128xf32>
    %c0_12 = arith.constant 0 : index
    %c0_13 = arith.constant 0 : index
    %17 = vector.load %arg6[%c0_12, %c0_13] : memref<1x128xf32, #tpu.memory_space<vmem>>, vector<1x128xf32>
    %18 = vector.broadcast %17 : vector<1x128xf32> to vector<128x128xf32>
    %19 = arith.mulf %16, %18 : vector<128x128xf32>
    %cst_14 = arith.constant dense<0.000000e+00> : vector<128xf32>
    %20 = vector.multi_reduction <add>, %19, %cst_14 [1] : vector<128x128xf32> to vector<128xf32>
    %21 = vector.shape_cast %20 : vector<128xf32> to vector<128x1xf32>
    %c0_15 = arith.constant 0 : index
    %c0_16 = arith.constant 0 : index
    %22 = memref.load %arg7[%c0_15, %c0_16] : memref<1x1xf32, #tpu.memory_space<smem>>
    %23 = vector.broadcast %22 : f32 to vector<128x1xf32>
    %24 = arith.addf %21, %23 : vector<128x1xf32>
    %c0_17 = arith.constant 0 : index
    %c0_18 = arith.constant 0 : index
    %25 = vector.load %arg8[%c0_17, %c0_18] : memref<128x1xf32, #tpu.memory_space<vmem>>, vector<128x1xf32>
    tpu.vector_store %arg8[%c0_17, %c0_18], %24 {strides = array<i32>} : memref<128x1xf32, #tpu.memory_space<vmem>>, vector<128x1xf32>,
    return
  }
  func.func @transform_0(%arg0: i32) -> (i32, i32) {
    %c0_i32 = arith.constant 0 : i32
    %c0_i32_0 = arith.constant 0 : i32
    return %arg0, %c0_i32 : i32, i32
  }
  func.func @transform_1(%arg0: i32) -> (i32, i32) {
    %c0_i32 = arith.constant 0 : i32
    %c0_i32_0 = arith.constant 0 : i32
    %c0_i32_1 = arith.constant 0 : i32
    return %c0_i32, %c0_i32_0 : i32, i32
  }
  func.func @transform_2(%arg0: i32) -> (i32, i32) {
    %c0_i32 = arith.constant 0 : i32
    %c0_i32_0 = arith.constant 0 : i32
    %c0_i32_1 = arith.constant 0 : i32
    return %c0_i32, %c0_i32_0 : i32, i32
  }
  func.func @transform_3(%arg0: i32) -> (i32, i32) {
    %c0_i32 = arith.constant 0 : i32
    %c0_i32_0 = arith.constant 0 : i32
    %c0_i32_1 = arith.constant 0 : i32
    return %c0_i32, %c0_i32_0 : i32, i32
  }
  func.func @transform_4(%arg0: i32) -> (i32, i32) {
    %c0_i32 = arith.constant 0 : i32
    %c0_i32_0 = arith.constant 0 : i32
    %c0_i32_1 = arith.constant 0 : i32
    return %c0_i32, %c0_i32_0 : i32, i32
  }
  func.func @transform_5(%arg0: i32) -> (i32, i32) {
    %c0_i32 = arith.constant 0 : i32
    %c0_i32_0 = arith.constant 0 : i32
    %c0_i32_1 = arith.constant 0 : i32
    return %c0_i32, %c0_i32_0 : i32, i32
  }
  func.func @transform_6(%arg0: i32) -> (i32, i32) {
    %c0_i32 = arith.constant 0 : i32
    %c0_i32_0 = arith.constant 0 : i32
    %c0_i32_1 = arith.constant 0 : i32
    return %c0_i32, %c0_i32_0 : i32, i32
  }
  func.func @transform_7(%arg0: i32) -> (i32, i32) {
    %c0_i32 = arith.constant 0 : i32
    %c0_i32_0 = arith.constant 0 : i32
    return %arg0, %c0_i32 : i32, i32
  }
}

</mosaic_0001>

<llo_original>
// kernel: tpu_custom_call.1
$region0: #{tpu_custom_call.1}
  #allocation0 [shape = 'u32[]', space=smem, size = 0x4, offset = 0x4, fixed_abs, tag = 'smem constant byte address 0x4 - core index']
  #allocation1 [shape = 'u32[144,128]{1,0:T(1,128)}', space=vmem, size = 0x12000, scoped, tag = 'internal scratch']
  #allocation2 [shape = 'f32[1,1]{1,0:T(1,128)S(6)}', space=smem, size = 0x200, scoped, tag = 'scoped memory for tpu_custom_call.1']
  %s0 = inlined_call_operand.vmem [shape: f32[256,32], index: 0, kind: input, shape index: {}]
  %s1 = inlined_call_operand.vmem [shape: f32[32,128], index: 1, kind: input, shape index: {}]
  %s2 = inlined_call_operand.vmem [shape: f32[1,128], index: 2, kind: input, shape index: {}]
  %s3 = inlined_call_operand.vmem [shape: f32[128,128], index: 3, kind: input, shape index: {}]
  %s4 = inlined_call_operand.vmem [shape: f32[1,128], index: 4, kind: input, shape index: {}]
  %s5 = inlined_call_operand.vmem [shape: f32[1,128], index: 5, kind: input, shape index: {}]
  %s6 = inlined_call_operand.<no memory space> [shape: f32[1,1], index: 6, kind: input, shape index: {}]
  %s7 = inlined_call_operand.vmem [shape: f32[256,1], index: 7, kind: output, shape index: {}]
  %s8 = sld [smem:[#allocation0]]
  $region61: #{tpu_custom_call.1} parent=0
    _
  %s10 = ssub.s32 1, %s8
  %s11 = scalar_select 0, %s10, %s8
  %12 = sst [smem:[#allocation2]] %s6
  loop: start=0, step=1, limit=4
  $region2: #{tpu_custom_call.1} parent=0 // loop_pre_header
    _
  $region3: #{tpu_custom_call.1} parent=0 // loop_header
    %s14 = sphi 0, %s18
    %p15 = scmp.ge.s32.totalorder %s14, 4
    %s24 = sphi 0, %s26
    %s27 = sphi 0, %s24
    %s28 = sphi 0, %s27
    %s44 = sphi 0, %s28
    %s48 = sphi 0, %s48
    %s50 = sphi 0, %s48
    %s51 = sphi 0, %s50
    %s65 = sphi 0, %s51
    %s69 = sphi 0, %s69
    %s71 = sphi 0, %s69
    %s72 = sphi 0, %s71
    %s86 = sphi 0, %s72
    %s90 = sphi 0, %s90
    %s92 = sphi 0, %s90
    %s93 = sphi 0, %s92
    %s107 = sphi 0, %s93
    %s111 = sphi 0, %s111
    %s113 = sphi 0, %s111
    %s114 = sphi 0, %s113
    %s128 = sphi 0, %s114
    %s132 = sphi 0, %s132
    %s134 = sphi 0, %s132
    %s135 = sphi 0, %s134
    %s149 = sphi 0, %s135
    %s153 = sphi 0, %s153
    %s155 = sphi 0, %s153
    %s156 = sphi 0, %s155
    %s170 = sphi 0, %s156
    %s176 = sphi 0, %s178
    %s179 = sphi 0, %s176
    %s180 = sphi 0, %s179
    %s196 = sphi 0, %s180
  $region4: #{tpu_custom_call.1} parent=0 // loop_header_branch
    %17 = sbr.rel (%p15) target = $region8
  $region5: #{tpu_custom_call.1} parent=0 // loop_body
    %s19 = ssub.s32 %s14, 1
    %s20 = ssub.s32 %s14, 2
    %s21 = sadd.s32 %s14, 1
    %s22 = ssub.s32 %s14, %s21
    %p23 = scmp.eq.s32.totalorder %s22, 0
    %s25 = sadd.s32 %s24, 1
    %s26 = scalar_select %p23, %s24, %s25
    %p29 = pneg %p23
    %p30 = scmp.eq.s32.totalorder %s14, 1
    %p31 = por %p29, %p30
    %p32 = scmp.ne.s32.totalorder %s24, %s27
    %p33 = scmp.eq.s32.totalorder %s14, 0
    %p34 = por %p32, %p33
    %p35 = scmp.ne.s32.totalorder %s24, %s27
    %p36 = scmp.eq.s32.totalorder %s19, 1
    %p37 = por %p35, %p36
    %p38 = scmp.ne.s32.totalorder %s27, %s28
    %p39 = scmp.eq.s32.totalorder %s19, 0
    %p40 = por %p38, %p39
    %p41 = scmp.ne.s32.totalorder %s27, %s28
    %p42 = scmp.eq.s32.totalorder %s20, 1
    %p43 = por %p41, %p42
    %p45 = scmp.ne.s32.totalorder %s28, %s44
    %p46 = scmp.eq.s32.totalorder %s20, 0
    %p47 = por %p45, %p46
    %s49 = sadd.s32 %s48, 1
    %p52 = scmp.eq.s32.totalorder %s14, 1
    %p53 = scmp.ne.s32.totalorder %s48, %s50
    %p54 = scmp.eq.s32.totalorder %s14, 0
    %p55 = por %p53, %p54
    %p56 = scmp.ne.s32.totalorder %s48, %s50
    %p57 = scmp.eq.s32.totalorder %s19, 1
    %p58 = por %p56, %p57
    %p59 = scmp.ne.s32.totalorder %s50, %s51
    %p60 = scmp.eq.s32.totalorder %s19, 0
    %p61 = por %p59, %p60
    %p62 = scmp.ne.s32.totalorder %s50, %s51
    %p63 = scmp.eq.s32.totalorder %s20, 1
    %p64 = por %p62, %p63
    %p66 = scmp.ne.s32.totalorder %s51, %s65
    %p67 = scmp.eq.s32.totalorder %s20, 0
    %p68 = por %p66, %p67
    %s70 = sadd.s32 %s69, 1
    %p73 = scmp.eq.s32.totalorder %s14, 1
    %p74 = scmp.ne.s32.totalorder %s69, %s71
    %p75 = scmp.eq.s32.totalorder %s14, 0
    %p76 = por %p74, %p75
    %p77 = scmp.ne.s32.totalorder %s69, %s71
    %p78 = scmp.eq.s32.totalorder %s19, 1
    %p79 = por %p77, %p78
    %p80 = scmp.ne.s32.totalorder %s71, %s72
    %p81 = scmp.eq.s32.totalorder %s19, 0
    %p82 = por %p80, %p81
    %p83 = scmp.ne.s32.totalorder %s71, %s72
    %p84 = scmp.eq.s32.totalorder %s20, 1
    %p85 = por %p83, %p84
    %p87 = scmp.ne.s32.totalorder %s72, %s86
    %p88 = scmp.eq.s32.totalorder %s20, 0
    %p89 = por %p87, %p88
    %s91 = sadd.s32 %s90, 1
    %p94 = scmp.eq.s32.totalorder %s14, 1
    %p95 = scmp.ne.s32.totalorder %s90, %s92
    %p96 = scmp.eq.s32.totalorder %s14, 0
    %p97 = por %p95, %p96
    %p98 = scmp.ne.s32.totalorder %s90, %s92
    %p99 = scmp.eq.s32.totalorder %s19, 1
    %p100 = por %p98, %p99
    %p101 = scmp.ne.s32.totalorder %s92, %s93
    %p102 = scmp.eq.s32.totalorder %s19, 0
    %p103 = por %p101, %p102
    %p104 = scmp.ne.s32.totalorder %s92, %s93
    %p105 = scmp.eq.s32.totalorder %s20, 1
    %p106 = por %p104, %p105
    %p108 = scmp.ne.s32.totalorder %s93, %s107
    %p109 = scmp.eq.s32.totalorder %s20, 0
    %p110 = por %p108, %p109
    %s112 = sadd.s32 %s111, 1
    %p115 = scmp.eq.s32.totalorder %s14, 1
    %p116 = scmp.ne.s32.totalorder %s111, %s113
    %p117 = scmp.eq.s32.totalorder %s14, 0
    %p118 = por %p116, %p117
    %p119 = scmp.ne.s32.totalorder %s111, %s113
    %p120 = scmp.eq.s32.totalorder %s19, 1
    %p121 = por %p119, %p120
    %p122 = scmp.ne.s32.totalorder %s113, %s114
    %p123 = scmp.eq.s32.totalorder %s19, 0
    %p124 = por %p122, %p123
    %p125 = scmp.ne.s32.totalorder %s113, %s114
    %p126 = scmp.eq.s32.totalorder %s20, 1
    %p127 = por %p125, %p126
    %p129 = scmp.ne.s32.totalorder %s114, %s128
    %p130 = scmp.eq.s32.totalorder %s20, 0
    %p131 = por %p129, %p130
    %s133 = sadd.s32 %s132, 1
    %p136 = scmp.eq.s32.totalorder %s14, 1
    %p137 = scmp.ne.s32.totalorder %s132, %s134
    %p138 = scmp.eq.s32.totalorder %s14, 0
    %p139 = por %p137, %p138
    %p140 = scmp.ne.s32.totalorder %s132, %s134
    %p141 = scmp.eq.s32.totalorder %s19, 1
    %p142 = por %p140, %p141
    %p143 = scmp.ne.s32.totalorder %s134, %s135
    %p144 = scmp.eq.s32.totalorder %s19, 0
    %p145 = por %p143, %p144
    %p146 = scmp.ne.s32.totalorder %s134, %s135
    %p147 = scmp.eq.s32.totalorder %s20, 1
    %p148 = por %p146, %p147
    %p150 = scmp.ne.s32.totalorder %s135, %s149
    %p151 = scmp.eq.s32.totalorder %s20, 0
    %p152 = por %p150, %p151
    %s154 = sadd.s32 %s153, 1
    %p157 = scmp.eq.s32.totalorder %s14, 1
    %p158 = scmp.ne.s32.totalorder %s153, %s155
    %p159 = scmp.eq.s32.totalorder %s14, 0
    %p160 = por %p158, %p159
    %p161 = scmp.ne.s32.totalorder %s153, %s155
    %p162 = scmp.eq.s32.totalorder %s19, 1
    %p163 = por %p161, %p162
    %p164 = scmp.ne.s32.totalorder %s155, %s156
    %p165 = scmp.eq.s32.totalorder %s19, 0
    %p166 = por %p164, %p165
    %p167 = scmp.ne.s32.totalorder %s155, %s156
    %p168 = scmp.eq.s32.totalorder %s20, 1
    %p169 = por %p167, %p168
    %p171 = scmp.ne.s32.totalorder %s156, %s170
    %p172 = scmp.eq.s32.totalorder %s20, 0
    %p173 = por %p171, %p172
    %s174 = ssub.s32 %s14, %s21
    %p175 = scmp.eq.s32.totalorder %s174, 0
    %s177 = sadd.s32 %s176, 1
    %s178 = scalar_select %p175, %s176, %s177
    %p181 = pneg %p175
    %p182 = scmp.eq.s32.totalorder %s14, 1
    %p183 = por %p181, %p182
    %p184 = scmp.ne.s32.totalorder %s176, %s179
    %p185 = scmp.eq.s32.totalorder %s14, 0
    %p186 = por %p184, %p185
    %p187 = scmp.ne.s32.totalorder %s176, %s179
    %p188 = scmp.eq.s32.totalorder %s19, 1
    %p189 = por %p187, %p188
    %p190 = scmp.ne.s32.totalorder %s179, %s180
    %p191 = scmp.eq.s32.totalorder %s19, 0
    %p192 = por %p190, %p191
    %p193 = scmp.ne.s32.totalorder %s179, %s180
    %p194 = scmp.eq.s32.totalorder %s20, 1
    %p195 = por %p193, %p194
    %p197 = scmp.ne.s32.totalorder %s180, %s196
    %p198 = scmp.eq.s32.totalorder %s20, 0
    %p199 = por %p197, %p198
    %p200 = scmp.le.s32.totalorder 1, %s14
    %p201 = scmp.lt.s32.totalorder %s14, 3
    %p202 = pnand %p200, %p201
    %p203 = pneg %p202
    // Predicated region
    $region9: #{tpu_custom_call.1} parent=5 // pred_check
      _
    $region10: #{tpu_custom_call.1} parent=5 // pred_check_branch
      %205 = sbr.rel (%p202) target = $region12
    $region11: #{tpu_custom_call.1} parent=5 // pred_region
      %s206 = ssub.s32 %s14, 1
      // Predicated region
      $region13: #{tpu_custom_call.1} parent=11 // pred_check
        %p207 = pneg %p61
      $region14: #{tpu_custom_call.1} parent=11 // pred_check_branch
        %209 = sbr.rel (%p207) target = $region16
      $region15: #{tpu_custom_call.1} parent=11 // pred_region
        _
      $region16: #{tpu_custom_call.1} parent=11 // pred_fallthru
        _
      // Predicated region
      $region17: #{tpu_custom_call.1} parent=11 // pred_check
        %p210 = pneg %p82
      $region18: #{tpu_custom_call.1} parent=11 // pred_check_branch
        %212 = sbr.rel (%p210) target = $region20
      $region19: #{tpu_custom_call.1} parent=11 // pred_region
        _
      $region20: #{tpu_custom_call.1} parent=11 // pred_fallthru
        _
      // Predicated region
      $region21: #{tpu_custom_call.1} parent=11 // pred_check
        %p213 = pneg %p103
      $region22: #{tpu_custom_call.1} parent=11 // pred_check_branch
        %215 = sbr.rel (%p213) target = $region24
      $region23: #{tpu_custom_call.1} parent=11 // pred_region
        _
      $region24: #{tpu_custom_call.1} parent=11 // pred_fallthru
        _
      // Predicated region
      $region25: #{tpu_custom_call.1} parent=11 // pred_check
        %p216 = pneg %p124
      $region26: #{tpu_custom_call.1} parent=11 // pred_check_branch
        %218 = sbr.rel (%p216) target = $region28
      $region27: #{tpu_custom_call.1} parent=11 // pred_region
        _
      $region28: #{tpu_custom_call.1} parent=11 // pred_fallthru
        _
      // Predicated region
      $region29: #{tpu_custom_call.1} parent=11 // pred_check
        %p219 = pneg %p145
      $region30: #{tpu_custom_call.1} parent=11 // pred_check_branch
        %221 = sbr.rel (%p219) target = $region32
      $region31: #{tpu_custom_call.1} parent=11 // pred_region
        _
      $region32: #{tpu_custom_call.1} parent=11 // pred_fallthru
        _
      // Predicated region
      $region33: #{tpu_custom_call.1} parent=11 // pred_check
        %p222 = pneg %p166
      $region34: #{tpu_custom_call.1} parent=11 // pred_check_branch
        %224 = sbr.rel (%p222) target = $region36
      $region35: #{tpu_custom_call.1} parent=11 // pred_region
        _
      $region36: #{tpu_custom_call.1} parent=11 // pred_fallthru
        _
    $region12: #{tpu_custom_call.1} parent=5 // pred_fallthru
      _
    %p225 = scmp.lt.s32.totalorder %s14, 2
    // Predicated region
    $region37: #{tpu_custom_call.1} parent=5 // pred_check
      %p226 = pneg %p225
    $region38: #{tpu_custom_call.1} parent=5 // pred_check_branch
      %228 = sbr.rel (%p226) target = $region40
    $region39: #{tpu_custom_call.1} parent=5 // pred_region
      // Predicated region
      $region41: #{tpu_custom_call.1} parent=39 // pred_check
        %p229 = pneg %p34
      $region42: #{tpu_custom_call.1} parent=39 // pred_check_branch
        %231 = sbr.rel (%p229) target = $region44
      $region43: #{tpu_custom_call.1} parent=39 // pred_region
        %s232 = smul.u32 16, %s14
        %p233 = scmp.lt.s32.totalorder %s232, 31
        %s234 = scalar_select %p233, %s232, 31
        %s235 = smul.addr %s234, 8
        %s236 = scalar_lea.vmem %s0, %s235
        %s237 = smul.u32 16, %s14
      $region44: #{tpu_custom_call.1} parent=39 // pred_fallthru
        _
    $region40: #{tpu_custom_call.1} parent=5 // pred_fallthru
      _
    %p238 = scmp.le.s32.totalorder 1, %s14
    %p239 = scmp.lt.s32.totalorder %s14, 3
    %p240 = pnand %p238, %p239
    %p241 = pneg %p240
    // Predicated region
    $region45: #{tpu_custom_call.1} parent=5 // pred_check
      _
    $region46: #{tpu_custom_call.1} parent=5 // pred_check_branch
      %243 = sbr.rel (%p240) target = $region48
    $region47: #{tpu_custom_call.1} parent=5 // pred_region
      %s244 = ssub.s32 %s14, 1
      %s245 = smul.u32 16, %s19
      %p246 = scmp.lt.s32.totalorder %s245, 31
      %s247 = scalar_select %p246, %s245, 31
      %s248 = smul.addr %s247, 8
      %s249 = scalar_lea.vmem %s0, %s248
      %p250 = pneg %p40
      %p251 = pneg %p37
      %p252 = pneg %p61
      %p253 = pneg %p58
      %p254 = pneg %p82
      %p255 = pneg %p79
      %p256 = pneg %p103
      %p257 = pneg %p100
      %p258 = pneg %p124
      %p259 = pneg %p121
      %p260 = pneg %p145
      %p261 = pneg %p142
      %p262 = pneg %p166
      %p263 = pneg %p163
      %p264 = pneg %p192
      %p265 = pneg %p189
      %s266 = smul.u32 16, %s19
      %p267 = scmp.lt.s32.totalorder %s266, 31
      %s268 = scalar_select %p267, %s266, 31
      %s269 = smul.addr %s268, 8
      %s270 = scalar_lea.vmem %s7, %s269
      %s271 = smul.u32 16, %s19
      %p272 = scmp.lt.s32.totalorder %s271, 31
      %s273 = scalar_select %p272, %s271, 31
      %s274 = smul.addr %s273, 8
      %s275 = scalar_lea.vmem %s0, %s274
      %s276 = smul.u32 16, %s19
      %s277 = smul.u32 16, %s19
      %p278 = scmp.lt.s32.totalorder %s277, 31
      %s279 = scalar_select %p278, %s277, 31
      %s280 = smul.addr %s279, 8
      %s281 = scalar_lea.vmem %s7, %s280
      %s282 = smul.u32 16, %s19
      %v283 = vld [vmem:[%s275] sm:$0xff]
      %v284 = vld [vmem:[%s275 + $0x8] sm:$0xff]
      %v285 = vld [vmem:[%s275 + $0x10] sm:$0xff]
      %v286 = vld [vmem:[%s275 + $0x18] sm:$0xff]
      %v287 = vld [vmem:[%s275 + $0x20] sm:$0xff]
      %v288 = vld [vmem:[%s275 + $0x28] sm:$0xff]
      %v289 = vld [vmem:[%s275 + $0x30] sm:$0xff]
      %v290 = vld [vmem:[%s275 + $0x38] sm:$0xff]
      %v291 = vld [vmem:[%s275 + $0x40] sm:$0xff]
      %v292 = vld [vmem:[%s275 + $0x48] sm:$0xff]
      %v293 = vld [vmem:[%s275 + $0x50] sm:$0xff]
      %v294 = vld [vmem:[%s275 + $0x58] sm:$0xff]
      %v295 = vld [vmem:[%s275 + $0x60] sm:$0xff]
      %v296 = vld [vmem:[%s275 + $0x68] sm:$0xff]
      %v297 = vld [vmem:[%s275 + $0x70] sm:$0xff]
      %v298 = vld [vmem:[%s275 + $0x78] sm:$0xff]
      %v299 = vld [vmem:[%s1] sm:$0xff]
      %v300 = vld [vmem:[%s1 + $0x8] sm:$0xff]
      %v301 = vld [vmem:[%s1 + $0x10] sm:$0xff]
      %v302 = vld [vmem:[%s1 + $0x18] sm:$0xff]
      %v303 = vld [vmem:[%s2] sm:$0x1]
      %v305 = vlaneseq
      %v306 = vshrl.u32 %v305, 7
      %v307 = vsub.s32 0, %v306
      %v308 = vrot.slane %v303, %v307
      %vm310 = vcmask 261120
      %v312 = vsel %vm310, %v283, 0
      %v315 = vsel %vm310, %v284, 0
      %v318 = vsel %vm310, %v285, 0
      %v321 = vsel %vm310, %v286, 0
      %v324 = vsel %vm310, %v287, 0
      %v327 = vsel %vm310, %v288, 0
      %v330 = vsel %vm310, %v289, 0
      %v333 = vsel %vm310, %v290, 0
      %v336 = vsel %vm310, %v291, 0
      %v339 = vsel %vm310, %v292, 0
      %v342 = vsel %vm310, %v293, 0
      %v345 = vsel %vm310, %v294, 0
      %v348 = vsel %vm310, %v295, 0
      %v351 = vsel %vm310, %v296, 0
      %v354 = vsel %vm310, %v297, 0
      %v357 = vsel %vm310, %v298, 0
      %359 = vmatprep.subr.mxu0 0.0
      %360 = vmatpush1.msra.mxu0 %v299
      %361 = vmatprep.subr.mxu0 0.0
      %362 = vmatpush1.msra.mxu0 %v300
      %363 = vmatprep.subr.mxu0 0.0
      %364 = vmatpush1.msra.mxu0 %v301
      %365 = vmatprep.subr.mxu0 0.0
      %366 = vmatpush1.msra.mxu0 %v302
      %367 = vmatprep.subr.mxu0 0.0
      %368 = vmatpush1.msra.mxu0 0.0
      %369 = vmatprep.subr.mxu0 0.0
      %370 = vmatpush1.msra.mxu0 0.0
      %371 = vmatprep.subr.mxu0 0.0
      %372 = vmatpush1.msra.mxu0 0.0
      %373 = vmatprep.subr.mxu0 0.0
      %374 = vmatpush1.msra.mxu0 0.0
      %375 = vmatprep.subr.mxu0 0.0
      %376 = vmatpush1.msra.mxu0 0.0
      %377 = vmatprep.subr.mxu0 0.0
      %378 = vmatpush1.msra.mxu0 0.0
      %379 = vmatprep.subr.mxu0 0.0
      %380 = vmatpush1.msra.mxu0 0.0
      %381 = vmatprep.subr.mxu0 0.0
      %382 = vmatpush1.msra.mxu0 0.0
      %383 = vmatprep.subr.mxu0 0.0
      %384 = vmatpush1.msra.mxu0 0.0
      %385 = vmatprep.subr.mxu0 0.0
      %386 = vmatpush1.msra.mxu0 0.0
      %387 = vmatprep.subr.mxu0 0.0
      %388 = vmatpush1.msra.mxu0 0.0
      %389 = vmatprep.subr.mxu0 0.0
      %390 = vmatpush1.msra.mxu0 0.0
      %391 = vmatprep.subr.mxu0 0.0
      %392 = vmatpush1.msra.mxu0 0.0
      %393 = vmatprep.subr.mxu0 0.0
      %394 = vmatpush1.msra.mxu0 0.0
      %395 = vmatprep.subr.mxu0 0.0
      %396 = vmatpush1.msra.mxu0 0.0
      %397 = vmatprep.subr.mxu0 0.0
      %398 = vmatpush1.msra.mxu0 0.0
      %399 = vmatprep.subr.mxu0 0.0
      %400 = vmatpush1.msra.mxu0 0.0
      %401 = vmatprep.subr.mxu0 0.0
      %402 = vmatpush1.msra.mxu0 0.0
      %403 = vmatprep.subr.mxu0 0.0
      %404 = vmatpush1.msra.mxu0 0.0
      %405 = vmatprep.subr.mxu0 0.0
      %406 = vmatpush1.msra.mxu0 0.0
      %407 = vmatprep.subr.mxu0 0.0
      %408 = vmatpush1.msra.mxu0 0.0
      %409 = vmatprep.subr.mxu0 0.0
      %410 = vmatpush1.msra.mxu0 0.0
      %411 = vmatprep.subr.mxu0 0.0
      %412 = vmatpush1.msra.mxu0 0.0
      %413 = vmatprep.subr.mxu0 0.0
      %414 = vmatpush1.msra.mxu0 0.0
      %415 = vmatprep.subr.mxu0 0.0
      %416 = vmatpush1.msra.mxu0 0.0
      %417 = vmatprep.subr.mxu0 0.0
      %418 = vmatpush1.msra.mxu0 0.0
      %419 = vmatprep.subr.mxu0 0.0
      %420 = vmatpush1.msra.mxu0 0.0
      %421 = vmatprep.subr.mxu0 0.0
      %422 = vmatpush1.msra.mxu0 0.0
      %423 = vmatprep.mubr.f32.mxu0 0.0
      %424 = vmatmul.mubr.f32.gmra.mrb[0].mxu0 %v312
      %v425 = vpop.f32.mrb[0].mxu0
      %v426 = vadd.f32 %v308, %v425
      %v427 = vpop.f32.mrb[0].mxu0
      %428 = vmatprep.mubr.f32.mxu0 0.0
      %429 = vmatmul.mubr.f32.gmra.mrb[0].mxu0 %v315
      %v430 = vpop.f32.mrb[0].mxu0
      %v431 = vadd.f32 %v308, %v430
      %v432 = vpop.f32.mrb[0].mxu0
      %433 = vmatprep.mubr.f32.mxu0 0.0
      %434 = vmatmul.mubr.f32.gmra.mrb[0].mxu0 %v318
      %v435 = vpop.f32.mrb[0].mxu0
      %v436 = vadd.f32 %v308, %v435
      %v437 = vpop.f32.mrb[0].mxu0
      %438 = vmatprep.mubr.f32.mxu0 0.0
      %439 = vmatmul.mubr.f32.gmra.mrb[0].mxu0 %v321
      %v440 = vpop.f32.mrb[0].mxu0
      %v441 = vadd.f32 %v308, %v440
      %v442 = vpop.f32.mrb[0].mxu0
      %443 = vmatprep.mubr.f32.mxu0 0.0
      %444 = vmatmul.mubr.f32.gmra.mrb[0].mxu0 %v324
      %v445 = vpop.f32.mrb[0].mxu0
      %v446 = vadd.f32 %v308, %v445
      %v447 = vpop.f32.mrb[0].mxu0
      %448 = vmatprep.mubr.f32.mxu0 0.0
      %449 = vmatmul.mubr.f32.gmra.mrb[0].mxu0 %v327
      %v450 = vpop.f32.mrb[0].mxu0
      %v451 = vadd.f32 %v308, %v450
      %v452 = vpop.f32.mrb[0].mxu0
      %453 = vmatprep.mubr.f32.mxu0 0.0
      %454 = vmatmul.mubr.f32.gmra.mrb[0].mxu0 %v330
      %v455 = vpop.f32.mrb[0].mxu0
      %v456 = vadd.f32 %v308, %v455
      %v457 = vpop.f32.mrb[0].mxu0
      %458 = vmatprep.mubr.f32.mxu0 0.0
      %459 = vmatmul.mubr.f32.gmra.mrb[0].mxu0 %v333
      %v460 = vpop.f32.mrb[0].mxu0
      %v461 = vadd.f32 %v308, %v460
      %v462 = vpop.f32.mrb[0].mxu0
      %463 = vmatprep.mubr.f32.mxu0 0.0
      %464 = vmatmul.mubr.f32.gmra.mrb[0].mxu0 %v336
      %v465 = vpop.f32.mrb[0].mxu0
      %v466 = vadd.f32 %v308, %v465
      %v467 = vpop.f32.mrb[0].mxu0
      %468 = vmatprep.mubr.f32.mxu0 0.0
      %469 = vmatmul.mubr.f32.gmra.mrb[0].mxu0 %v339
      %v470 = vpop.f32.mrb[0].mxu0
      %v471 = vadd.f32 %v308, %v470
      %v472 = vpop.f32.mrb[0].mxu0
      %473 = vmatprep.mubr.f32.mxu0 0.0
      %474 = vmatmul.mubr.f32.gmra.mrb[0].mxu0 %v342
      %v475 = vpop.f32.mrb[0].mxu0
      %v476 = vadd.f32 %v308, %v475
      %v477 = vpop.f32.mrb[0].mxu0
      %478 = vmatprep.mubr.f32.mxu0 0.0
      %479 = vmatmul.mubr.f32.gmra.mrb[0].mxu0 %v345
      %v480 = vpop.f32.mrb[0].mxu0
      %v481 = vadd.f32 %v308, %v480
      %v482 = vpop.f32.mrb[0].mxu0
      %483 = vmatprep.mubr.f32.mxu0 0.0
      %484 = vmatmul.mubr.f32.gmra.mrb[0].mxu0 %v348
      %v485 = vpop.f32.mrb[0].mxu0
      %v486 = vadd.f32 %v308, %v485
      %v487 = vpop.f32.mrb[0].mxu0
      %488 = vmatprep.mubr.f32.mxu0 0.0
      %489 = vmatmul.mubr.f32.gmra.mrb[0].mxu0 %v351
      %v490 = vpop.f32.mrb[0].mxu0
      %v491 = vadd.f32 %v308, %v490
      %v492 = vpop.f32.mrb[0].mxu0
      %493 = vmatprep.mubr.f32.mxu0 0.0
      %494 = vmatmul.mubr.f32.gmra.mrb[0].mxu0 %v354
      %v495 = vpop.f32.mrb[0].mxu0
      %v496 = vadd.f32 %v308, %v495
      %v497 = vpop.f32.mrb[0].mxu0
      %498 = vmatprep.mubr.f32.mxu0 0.0
      %499 = vmatmul.mubr.f32.gmra.mrb[0].mxu0 %v357
      %v500 = vpop.f32.mrb[0].mxu0
      %v501 = vadd.f32 %v308, %v500
      %v502 = vpop.f32.mrb[0].mxu0
      %503 = vdwg.mxu0
      %v504 = vmul.f32 %v426, 0.01
      %v505 = vmul.f32 %v431, 0.01
      %v506 = vmul.f32 %v436, 0.01
      %v507 = vmul.f32 %v441, 0.01
      %v508 = vmul.f32 %v446, 0.01
      %v509 = vmul.f32 %v451, 0.01
      %v510 = vmul.f32 %v456, 0.01
      %v511 = vmul.f32 %v461, 0.01
      %v512 = vmul.f32 %v466, 0.01
      %v513 = vmul.f32 %v471, 0.01
      %v514 = vmul.f32 %v476, 0.01
      %v515 = vmul.f32 %v481, 0.01
      %v516 = vmul.f32 %v486, 0.01
      %v517 = vmul.f32 %v491, 0.01
      %v518 = vmul.f32 %v496, 0.01
      %v519 = vmul.f32 %v501, 0.01
      %v520 = vmax.f32 %v426, %v504
      %v521 = vmax.f32 %v431, %v505
      %v522 = vmax.f32 %v436, %v506
      %v523 = vmax.f32 %v441, %v507
      %v524 = vmax.f32 %v446, %v508
      %v525 = vmax.f32 %v451, %v509
      %v526 = vmax.f32 %v456, %v510
      %v527 = vmax.f32 %v461, %v511
      %v528 = vmax.f32 %v466, %v512
      %v529 = vmax.f32 %v471, %v513
      %v530 = vmax.f32 %v476, %v514
      %v531 = vmax.f32 %v481, %v515
      %v532 = vmax.f32 %v486, %v516
      %v533 = vmax.f32 %v491, %v517
      %v534 = vmax.f32 %v496, %v518
      %v535 = vmax.f32 %v501, %v519
      %v536 = vld [vmem:[%s3] sm:$0xff]
      %v537 = vld [vmem:[%s3 + $0x8] sm:$0xff]
      %v538 = vld [vmem:[%s3 + $0x10] sm:$0xff]
      %v539 = vld [vmem:[%s3 + $0x18] sm:$0xff]
      %v540 = vld [vmem:[%s3 + $0x20] sm:$0xff]
      %v541 = vld [vmem:[%s3 + $0x28] sm:$0xff]
      %v542 = vld [vmem:[%s3 + $0x30] sm:$0xff]
      %v543 = vld [vmem:[%s3 + $0x38] sm:$0xff]
      %v544 = vld [vmem:[%s3 + $0x40] sm:$0xff]
      %v545 = vld [vmem:[%s3 + $0x48] sm:$0xff]
      %v546 = vld [vmem:[%s3 + $0x50] sm:$0xff]
      %v547 = vld [vmem:[%s3 + $0x58] sm:$0xff]
      %v548 = vld [vmem:[%s3 + $0x60] sm:$0xff]
      %v549 = vld [vmem:[%s3 + $0x68] sm:$0xff]
      %v550 = vld [vmem:[%s3 + $0x70] sm:$0xff]
      %v551 = vld [vmem:[%s3 + $0x78] sm:$0xff]
      %v552 = vld [vmem:[%s4] sm:$0x1]
      %v554 = vlaneseq
      %v555 = vshrl.u32 %v554, 7
      %v556 = vsub.s32 0, %v555
      %v557 = vrot.slane %v552, %v556
      %559 = vmatprep.subr.mxu0 0.0
      %560 = vmatpush1.msra.mxu0 %v536
      %561 = vmatprep.subr.mxu0 0.0
      %562 = vmatpush1.msra.mxu0 %v537
      %563 = vmatprep.subr.mxu0 0.0
      %564 = vmatpush1.msra.mxu0 %v538
      %565 = vmatprep.subr.mxu0 0.0
      %566 = vmatpush1.msra.mxu0 %v539
      %567 = vmatprep.subr.mxu0 0.0
      %568 = vmatpush1.msra.mxu0 %v540
      %569 = vmatprep.subr.mxu0 0.0
      %570 = vmatpush1.msra.mxu0 %v541
      %571 = vmatprep.subr.mxu0 0.0
      %572 = vmatpush1.msra.mxu0 %v542
      %573 = vmatprep.subr.mxu0 0.0
      %574 = vmatpush1.msra.mxu0 %v543
      %575 = vmatprep.subr.mxu0 0.0
      %576 = vmatpush1.msra.mxu0 %v544
      %577 = vmatprep.subr.mxu0 0.0
      %578 = vmatpush1.msra.mxu0 %v545
      %579 = vmatprep.subr.mxu0 0.0
      %580 = vmatpush1.msra.mxu0 %v546
      %581 = vmatprep.subr.mxu0 0.0
      %582 = vmatpush1.msra.mxu0 %v547
      %583 = vmatprep.subr.mxu0 0.0
      %584 = vmatpush1.msra.mxu0 %v548
      %585 = vmatprep.subr.mxu0 0.0
      %586 = vmatpush1.msra.mxu0 %v549
      %587 = vmatprep.subr.mxu0 0.0
      %588 = vmatpush1.msra.mxu0 %v550
      %589 = vmatprep.subr.mxu0 0.0
      %590 = vmatpush1.msra.mxu0 %v551
      %591 = vmatprep.subr.mxu0 0.0
      %592 = vmatpush1.msra.mxu0 0.0
      %593 = vmatprep.subr.mxu0 0.0
      %594 = vmatpush1.msra.mxu0 0.0
      %595 = vmatprep.subr.mxu0 0.0
      %596 = vmatpush1.msra.mxu0 0.0
      %597 = vmatprep.subr.mxu0 0.0
      %598 = vmatpush1.msra.mxu0 0.0
      %599 = vmatprep.subr.mxu0 0.0
      %600 = vmatpush1.msra.mxu0 0.0
      %601 = vmatprep.subr.mxu0 0.0
      %602 = vmatpush1.msra.mxu0 0.0
      %603 = vmatprep.subr.mxu0 0.0
      %604 = vmatpush1.msra.mxu0 0.0
      %605 = vmatprep.subr.mxu0 0.0
      %606 = vmatpush1.msra.mxu0 0.0
      %607 = vmatprep.subr.mxu0 0.0
      %608 = vmatpush1.msra.mxu0 0.0
      %609 = vmatprep.subr.mxu0 0.0
      %610 = vmatpush1.msra.mxu0 0.0
      %611 = vmatprep.subr.mxu0 0.0
      %612 = vmatpush1.msra.mxu0 0.0
      %613 = vmatprep.subr.mxu0 0.0
      %614 = vmatpush1.msra.mxu0 0.0
      %615 = vmatprep.subr.mxu0 0.0
      %616 = vmatpush1.msra.mxu0 0.0
      %617 = vmatprep.subr.mxu0 0.0
      %618 = vmatpush1.msra.mxu0 0.0
      %619 = vmatprep.subr.mxu0 0.0
      %620 = vmatpush1.msra.mxu0 0.0
      %621 = vmatprep.subr.mxu0 0.0
      %622 = vmatpush1.msra.mxu0 0.0
      %623 = vmatprep.mubr.f32.mxu0 0.0
      %624 = vmatmul.mubr.f32.gmra.mrb[0].mxu0 %v520
      %v625 = vpop.f32.mrb[0].mxu0
      %v626 = vadd.f32 %v557, %v625
      %v627 = vpop.f32.mrb[0].mxu0
      %628 = vmatprep.mubr.f32.mxu0 0.0
      %629 = vmatmul.mubr.f32.gmra.mrb[0].mxu0 %v521
      %v630 = vpop.f32.mrb[0].mxu0
      %v631 = vadd.f32 %v557, %v630
      %v632 = vpop.f32.mrb[0].mxu0
      %633 = vmatprep.mubr.f32.mxu0 0.0
      %634 = vmatmul.mubr.f32.gmra.mrb[0].mxu0 %v522
      %v635 = vpop.f32.mrb[0].mxu0
      %v636 = vadd.f32 %v557, %v635
      %v637 = vpop.f32.mrb[0].mxu0
      %638 = vmatprep.mubr.f32.mxu0 0.0
      %639 = vmatmul.mubr.f32.gmra.mrb[0].mxu0 %v523
      %v640 = vpop.f32.mrb[0].mxu0
      %v641 = vadd.f32 %v557, %v640
      %v642 = vpop.f32.mrb[0].mxu0
      %643 = vmatprep.mubr.f32.mxu0 0.0
      %644 = vmatmul.mubr.f32.gmra.mrb[0].mxu0 %v524
      %v645 = vpop.f32.mrb[0].mxu0
      %v646 = vadd.f32 %v557, %v645
      %v647 = vpop.f32.mrb[0].mxu0
      %648 = vmatprep.mubr.f32.mxu0 0.0
      %649 = vmatmul.mubr.f32.gmra.mrb[0].mxu0 %v525
      %v650 = vpop.f32.mrb[0].mxu0
      %v651 = vadd.f32 %v557, %v650
      %v652 = vpop.f32.mrb[0].mxu0
      %653 = vmatprep.mubr.f32.mxu0 0.0
      %654 = vmatmul.mubr.f32.gmra.mrb[0].mxu0 %v526
      %v655 = vpop.f32.mrb[0].mxu0
      %v656 = vadd.f32 %v557, %v655
      %v657 = vpop.f32.mrb[0].mxu0
      %658 = vmatprep.mubr.f32.mxu0 0.0
      %659 = vmatmul.mubr.f32.gmra.mrb[0].mxu0 %v527
      %v660 = vpop.f32.mrb[0].mxu0
      %v661 = vadd.f32 %v557, %v660
      %v662 = vpop.f32.mrb[0].mxu0
      %663 = vmatprep.mubr.f32.mxu0 0.0
      %664 = vmatmul.mubr.f32.gmra.mrb[0].mxu0 %v528
      %v665 = vpop.f32.mrb[0].mxu0
      %v666 = vadd.f32 %v557, %v665
      %v667 = vpop.f32.mrb[0].mxu0
      %668 = vmatprep.mubr.f32.mxu0 0.0
      %669 = vmatmul.mubr.f32.gmra.mrb[0].mxu0 %v529
      %v670 = vpop.f32.mrb[0].mxu0
      %v671 = vadd.f32 %v557, %v670
      %v672 = vpop.f32.mrb[0].mxu0
      %673 = vmatprep.mubr.f32.mxu0 0.0
      %674 = vmatmul.mubr.f32.gmra.mrb[0].mxu0 %v530
      %v675 = vpop.f32.mrb[0].mxu0
      %v676 = vadd.f32 %v557, %v675
      %v677 = vpop.f32.mrb[0].mxu0
      %678 = vmatprep.mubr.f32.mxu0 0.0
      %679 = vmatmul.mubr.f32.gmra.mrb[0].mxu0 %v531
      %v680 = vpop.f32.mrb[0].mxu0
      %v681 = vadd.f32 %v557, %v680
      %v682 = vpop.f32.mrb[0].mxu0
      %683 = vmatprep.mubr.f32.mxu0 0.0
      %684 = vmatmul.mubr.f32.gmra.mrb[0].mxu0 %v532
      %v685 = vpop.f32.mrb[0].mxu0
      %v686 = vadd.f32 %v557, %v685
      %v687 = vpop.f32.mrb[0].mxu0
      %688 = vmatprep.mubr.f32.mxu0 0.0
      %689 = vmatmul.mubr.f32.gmra.mrb[0].mxu0 %v533
      %v690 = vpop.f32.mrb[0].mxu0
      %v691 = vadd.f32 %v557, %v690
      %v692 = vpop.f32.mrb[0].mxu0
      %693 = vmatprep.mubr.f32.mxu0 0.0
      %694 = vmatmul.mubr.f32.gmra.mrb[0].mxu0 %v534
      %v695 = vpop.f32.mrb[0].mxu0
      %v696 = vadd.f32 %v557, %v695
      %v697 = vpop.f32.mrb[0].mxu0
      %698 = vmatprep.mubr.f32.mxu0 0.0
      %699 = vmatmul.mubr.f32.gmra.mrb[0].mxu0 %v535
      %v700 = vpop.f32.mrb[0].mxu0
      %v701 = vadd.f32 %v557, %v700
      %v702 = vpop.f32.mrb[0].mxu0
      %703 = vdwg.mxu0
      %v704 = vmul.f32 %v626, 0.01
      %v705 = vmul.f32 %v631, 0.01
      %v706 = vmul.f32 %v636, 0.01
      %v707 = vmul.f32 %v641, 0.01
      %v708 = vmul.f32 %v646, 0.01
      %v709 = vmul.f32 %v651, 0.01
      %v710 = vmul.f32 %v656, 0.01
      %v711 = vmul.f32 %v661, 0.01
      %v712 = vmul.f32 %v666, 0.01
      %v713 = vmul.f32 %v671, 0.01
      %v714 = vmul.f32 %v676, 0.01
      %v715 = vmul.f32 %v681, 0.01
      %v716 = vmul.f32 %v686, 0.01
      %v717 = vmul.f32 %v691, 0.01
      %v718 = vmul.f32 %v696, 0.01
      %v719 = vmul.f32 %v701, 0.01
      %v720 = vmax.f32 %v626, %v704
      %v721 = vmax.f32 %v631, %v705
      %v722 = vmax.f32 %v636, %v706
      %v723 = vmax.f32 %v641, %v707
      %v724 = vmax.f32 %v646, %v708
      %v725 = vmax.f32 %v651, %v709
      %v726 = vmax.f32 %v656, %v710
      %v727 = vmax.f32 %v661, %v711
      %v728 = vmax.f32 %v666, %v712
      %v729 = vmax.f32 %v671, %v713
      %v730 = vmax.f32 %v676, %v714
      %v731 = vmax.f32 %v681, %v715
      %v732 = vmax.f32 %v686, %v716
      %v733 = vmax.f32 %v691, %v717
      %v734 = vmax.f32 %v696, %v718
      %v735 = vmax.f32 %v701, %v719
      %v736 = vld [vmem:[%s5] sm:$0x1]
      %v738 = vlaneseq
      %v739 = vshrl.u32 %v738, 7
      %v740 = vsub.s32 0, %v739
      %v741 = vrot.slane %v736, %v740
      %v743 = vmul.f32 %v720, %v741
      %v744 = vmul.f32 %v721, %v741
      %v745 = vmul.f32 %v722, %v741
      %v746 = vmul.f32 %v723, %v741
      %v747 = vmul.f32 %v724, %v741
      %v748 = vmul.f32 %v725, %v741
      %v749 = vmul.f32 %v726, %v741
      %v750 = vmul.f32 %v727, %v741
      %v751 = vmul.f32 %v728, %v741
      %v752 = vmul.f32 %v729, %v741
      %v753 = vmul.f32 %v730, %v741
      %v754 = vmul.f32 %v731, %v741
      %v755 = vmul.f32 %v732, %v741
      %v756 = vmul.f32 %v733, %v741
      %v757 = vmul.f32 %v734, %v741
      %v758 = vmul.f32 %v735, %v741
      %759 = vadd.xlane.f32.xlu0 %v743
      %v760 = vpop.xlane.xlu0 %759
      %761 = vadd.xlane.f32.xlu0 %v744
      %v762 = vpop.xlane.xlu0 %761
      %763 = vadd.xlane.f32.xlu0 %v745
      %v764 = vpop.xlane.xlu0 %763
      %765 = vadd.xlane.f32.xlu0 %v746
      %v766 = vpop.xlane.xlu0 %765
      %767 = vadd.xlane.f32.xlu0 %v747
      %v768 = vpop.xlane.xlu0 %767
      %769 = vadd.xlane.f32.xlu0 %v748
      %v770 = vpop.xlane.xlu0 %769
      %771 = vadd.xlane.f32.xlu0 %v749
      %v772 = vpop.xlane.xlu0 %771
      %773 = vadd.xlane.f32.xlu0 %v750
      %v774 = vpop.xlane.xlu0 %773
      %775 = vadd.xlane.f32.xlu0 %v751
      %v776 = vpop.xlane.xlu0 %775
      %777 = vadd.xlane.f32.xlu0 %v752
      %v778 = vpop.xlane.xlu0 %777
      %779 = vadd.xlane.f32.xlu0 %v753
      %v780 = vpop.xlane.xlu0 %779
      %781 = vadd.xlane.f32.xlu0 %v754
      %v782 = vpop.xlane.xlu0 %781
      %783 = vadd.xlane.f32.xlu0 %v755
      %v784 = vpop.xlane.xlu0 %783
      %785 = vadd.xlane.f32.xlu0 %v756
      %v786 = vpop.xlane.xlu0 %785
      %787 = vadd.xlane.f32.xlu0 %v757
      %v788 = vpop.xlane.xlu0 %787
      %789 = vadd.xlane.f32.xlu0 %v758
      %v790 = vpop.xlane.xlu0 %789
      %s791 = sld [smem:[#allocation2]]
      %v792 = vstv %s791
      %v793 = vadd.f32 %v760, %v792
      %v794 = vadd.f32 %v762, %v792
      %v795 = vadd.f32 %v764, %v792
      %v796 = vadd.f32 %v766, %v792
      %v797 = vadd.f32 %v768, %v792
      %v798 = vadd.f32 %v770, %v792
      %v799 = vadd.f32 %v772, %v792
      %v800 = vadd.f32 %v774, %v792
      %v801 = vadd.f32 %v776, %v792
      %v802 = vadd.f32 %v778, %v792
      %v803 = vadd.f32 %v780, %v792
      %v804 = vadd.f32 %v782, %v792
      %v805 = vadd.f32 %v784, %v792
      %v806 = vadd.f32 %v786, %v792
      %v807 = vadd.f32 %v788, %v792
      %v808 = vadd.f32 %v790, %v792
      %vm809 = vcmask 7168
      %810 = vst.msk [vmem:[%s281] sm:$0xff] %vm809, %v793
      %811 = vst.msk [vmem:[%s281 + $0x8] sm:$0xff] %vm809, %v794
      %812 = vst.msk [vmem:[%s281 + $0x10] sm:$0xff] %vm809, %v795
      %813 = vst.msk [vmem:[%s281 + $0x18] sm:$0xff] %vm809, %v796
      %814 = vst.msk [vmem:[%s281 + $0x20] sm:$0xff] %vm809, %v797
      %815 = vst.msk [vmem:[%s281 + $0x28] sm:$0xff] %vm809, %v798
      %816 = vst.msk [vmem:[%s281 + $0x30] sm:$0xff] %vm809, %v799
      %817 = vst.msk [vmem:[%s281 + $0x38] sm:$0xff] %vm809, %v800
      %818 = vst.msk [vmem:[%s281 + $0x40] sm:$0xff] %vm809, %v801
      %819 = vst.msk [vmem:[%s281 + $0x48] sm:$0xff] %vm809, %v802
      %820 = vst.msk [vmem:[%s281 + $0x50] sm:$0xff] %vm809, %v803
      %821 = vst.msk [vmem:[%s281 + $0x58] sm:$0xff] %vm809, %v804
      %822 = vst.msk [vmem:[%s281 + $0x60] sm:$0xff] %vm809, %v805
      %823 = vst.msk [vmem:[%s281 + $0x68] sm:$0xff] %vm809, %v806
      %824 = vst.msk [vmem:[%s281 + $0x70] sm:$0xff] %vm809, %v807
      %825 = vst.msk [vmem:[%s281 + $0x78] sm:$0xff] %vm809, %v808
      %s826 = smul.u32 16, %s19
      %p827 = scmp.lt.s32.totalorder %s826, 31
      %s828 = scalar_select %p827, %s826, 31
      %s829 = smul.addr %s828, 8
      %s830 = scalar_lea.vmem %s7, %s829
      // Predicated region
      $region49: #{tpu_custom_call.1} parent=47 // pred_check
        %p831 = pneg %p189
      $region50: #{tpu_custom_call.1} parent=47 // pred_check_branch
        %833 = sbr.rel (%p831) target = $region52
      $region51: #{tpu_custom_call.1} parent=47 // pred_region
        %s834 = smul.u32 16, %s19
      $region52: #{tpu_custom_call.1} parent=47 // pred_fallthru
        _
    $region48: #{tpu_custom_call.1} parent=5 // pred_fallthru
      _
    %p835 = scmp.le.s32.totalorder 2, %s14
    // Predicated region
    $region53: #{tpu_custom_call.1} parent=5 // pred_check
      %p836 = pneg %p835
    $region54: #{tpu_custom_call.1} parent=5 // pred_check_branch
      %838 = sbr.rel (%p836) target = $region56
    $region55: #{tpu_custom_call.1} parent=5 // pred_region
      %s839 = ssub.s32 %s14, 2
      // Predicated region
      $region57: #{tpu_custom_call.1} parent=55 // pred_check
        %p840 = pneg %p195
      $region58: #{tpu_custom_call.1} parent=55 // pred_check_branch
        %842 = sbr.rel (%p840) target = $region60
      $region59: #{tpu_custom_call.1} parent=55 // pred_region
        %s843 = smul.u32 16, %s20
        %p844 = scmp.lt.s32.totalorder %s843, 31
        %s845 = scalar_select %p844, %s843, 31
        %s846 = smul.addr %s845, 8
        %s847 = scalar_lea.vmem %s7, %s846
      $region60: #{tpu_custom_call.1} parent=55 // pred_fallthru
        _
    $region56: #{tpu_custom_call.1} parent=5 // pred_fallthru
      _
  $region6: #{tpu_custom_call.1} parent=0 // loop_footer
    %s18 = sadd.s32 1, %s14
  $region7: #{tpu_custom_call.1} parent=0 // loop_footer_branch
    %13 = sbr.rel target = $region3
  $region8: #{tpu_custom_call.1} parent=0 // loop_exit
    _

</llo_original>
